<compile_context>
chip_gen: v7x
topology: tpu7x:2x2x1
jax: 0.10.0
libtpu: 0.0.40
codegen_flags: <defaults>
</compile_context>

<pallas_src>
import functools

import jax
import jax.numpy as jnp
from jax.experimental import pallas as pl
from jax.experimental.pallas import tpu as pltpu


def _sab_kernel(x_ref, w1t_ref, w2t_ref, w3t_ref, wsp_ref, bsp_ref, o_ref, *, inv_hw):
    """One block of TB batch elements per grid step (fully vectorized body).

    x_ref   : (TB, C, HW)  input slab (C on sublanes, HW on lanes)
    w1t_ref : (C, C)       fc.0 weight, pre-transposed  (y = p @ W1^T)
    w2t_ref : (C, C//16)   fc.1 weight, pre-transposed
    w3t_ref : (C//16, C)   fc.3 weight, pre-transposed
    wsp_ref : (C, 1)       1x1 conv weight with eval-mode BN scale folded in
    bsp_ref : (1,)         conv bias with BN scale/shift folded in (SMEM)
    o_ref   : (TB, C, HW)  output slab
    """
    x = x_ref[...]                                                     # (TB, C, HW)

    # ---- channel attention: global average pool (single lane reduction) -----
    p = jnp.sum(x, axis=-1) * inv_hw                                   # (TB, C)

    # ---- channel attention: 3-layer MLP, batched over TB on the sublanes ----
    y = jnp.dot(p, w1t_ref[...], preferred_element_type=jnp.float32)   # (TB, C)
    y = jnp.dot(y, w2t_ref[...], preferred_element_type=jnp.float32)   # (TB, C//16)
    y = jnp.maximum(y, 0.0)                                            # ReLU
    y = jnp.dot(y, w3t_ref[...], preferred_element_type=jnp.float32)   # (TB, C)
    att_ch = jax.nn.sigmoid(y)                                         # (TB, C)

    # ---- spatial attention (folded 1x1 conv + BN on x**2) -------------------
    wsp = wsp_ref[...][None, :, :]                                     # (1, C, 1)
    att_sp = jnp.sum((x * x) * wsp, axis=1, keepdims=True) + bsp_ref[0]  # (TB,1,HW)

    # ---- combine: att_ch*(att_sp*x) + x  ==  x*(att_ch*att_sp + 1) ----------
    # (x read once; shorter dependent chain on the streamed input)
    o_ref[...] = x * (att_ch[:, :, None] * att_sp + 1.0)


def _round_up(n, m):
    return ((n + m - 1) // m) * m


def sab_forward(x, params):
    """x: (B, C, H, W) float32 (NCHW, like PyTorch). Returns same shape."""
    B, C, H, W = x.shape
    HW = H * W
    # No padding / slicing round-trips: block last dims == full array dims, so
    # Mosaic handles any non-128-aligned HW tail internally.
    x_flat = x.astype(jnp.float32).reshape(B, C, HW)

    # Pre-transpose the MLP weights on the host (y = p @ W^T orientation),
    # avoiding per-step in-kernel transposes.
    w1t = params["fc_w1"].astype(jnp.float32).T          # (C, C)
    w2t = params["fc_w2"].astype(jnp.float32).T          # (C, C//16)
    w3t = params["fc_w3"].astype(jnp.float32).T          # (C//16, C)
    w_sp = params["conv_w"]                              # (C,)   Conv2d(C,1,1) weight
    b_sp = params["conv_b"]                              # ()     Conv2d bias
    gamma, beta = params["bn_gamma"], params["bn_beta"]
    rm, rv = params["bn_mean"], params["bn_var"]
    eps = 1e-5

    # Fold eval-mode BatchNorm into the 1x1-conv weight and bias.
    scale = gamma / jnp.sqrt(rv + eps)
    shift = beta - rm * scale
    w_eff = (w_sp * scale).reshape(C, 1).astype(jnp.float32)   # (C,1): C on sublanes
    b_eff = (b_sp * scale + shift).reshape(1).astype(jnp.float32)

    # ---- pick TB (batch elements per grid step) against a VMEM budget -------
    # VMEM accounting uses tile-padded sizes.  Resident ~= 2*(in) + 2*(out)
    # double-buffered blocks + ~3 slab-sized temporaries + weights.  The 24 MiB
    # budget and <=48 MiB scoped limit leave headroom on v7x (64 MiB/TC).
    per_batch_vmem = _round_up(C, 8) * _round_up(HW, 128) * 4
    weight_bytes = 2 * 4 * (
        _round_up(C, 8) * _round_up(C, 128)            # w1t
        + _round_up(C, 8) * _round_up(C // 16, 128)    # w2t
        + _round_up(C // 16, 8) * _round_up(C, 128)    # w3t
        + _round_up(C, 8) * 128                        # wsp
    )
    budget = 24 * 1024 * 1024 - weight_bytes
    tb = max(1, budget // (7 * per_batch_vmem))
    tb = int(min(tb, B))
    # Keep the DMA pipeline deep: once blocks reach ~1 MiB, target >= 8 grid
    # steps (>= 4 per v7x TensorCore).  Per-step overhead (~0.35 us) is
    # negligible against multi-MiB block DMAs.
    if tb * per_batch_vmem >= (1 << 20):
        tb = min(tb, max(1, B // 8))
    while B % tb:                                      # largest divisor of B <= tb
        tb -= 1
    grid = (B // tb,)
    # TODO(synk): if a single batch element exceeds the VMEM budget (huge
    # C*H*W), an HW-tiling fallback with cross-step pooling would be needed.

    block_bytes = tb * per_batch_vmem
    vmem_limit = int(min(48 * 1024 * 1024,
                         max(32 * 1024 * 1024,
                             7 * block_bytes + weight_bytes + (2 << 20))))

    kernel = functools.partial(_sab_kernel, inv_hw=1.0 / HW)
    out_flat = pl.pallas_call(
        kernel,
        out_shape=jax.ShapeDtypeStruct((B, C, HW), jnp.float32),
        grid=grid,
        in_specs=[
            pl.BlockSpec((tb, C, HW), lambda i: (i, 0, 0)),        # x block
            pl.BlockSpec((C, C), lambda i: (0, 0)),                # W1^T
            pl.BlockSpec((C, C // 16), lambda i: (0, 0)),          # W2^T
            pl.BlockSpec((C // 16, C), lambda i: (0, 0)),          # W3^T
            pl.BlockSpec((C, 1), lambda i: (0, 0)),                # folded conv weight
            pl.BlockSpec(memory_space=pltpu.MemorySpace.SMEM),     # folded conv bias
        ],
        out_specs=pl.BlockSpec((tb, C, HW), lambda i: (i, 0, 0)),
        compiler_params=pltpu.CompilerParams(
            dimension_semantics=("parallel",),
            vmem_limit_bytes=vmem_limit),
    )(x_flat, w1t, w2t, w3t, w_eff, b_eff)

    return out_flat.reshape(B, C, H, W)


def sab_reference(x, params):
    """Pure-JAX reference matching the PyTorch forward (eval-mode BN)."""
    B, C, H, W = x.shape
    w1, w2, w3 = params["fc_w1"], params["fc_w2"], params["fc_w3"]
    w_sp, b_sp = params["conv_w"], params["conv_b"]
    gamma, beta = params["bn_gamma"], params["bn_beta"]
    rm, rv = params["bn_mean"], params["bn_var"]
    eps = 1e-5

    p = jnp.mean(x, axis=(2, 3))                       # (B, C)
    y = p @ w1.T
    y = y @ w2.T
    y = jnp.maximum(y, 0.0)
    y = y @ w3.T
    att_ch = jax.nn.sigmoid(y).reshape(B, C, 1, 1)

    conv = jnp.einsum("bchw,c->bhw", x * x, w_sp) + b_sp
    bn = (conv - rm) / jnp.sqrt(rv + eps) * gamma + beta
    att_sp = bn.reshape(B, 1, H, W)

    return att_ch * (att_sp * x) + x


def make_params(key, channel):
    """Deterministic synthetic parameters matching SAB.__init__ shapes."""
    c = channel
    k1, k2, k3, k4, k5 = jax.random.split(key, 5)
    return {
        "fc_w1": (jax.random.normal(k1, (c, c), jnp.float32) * 0.1),
        "fc_w2": (jax.random.normal(k2, (c // 16, c), jnp.float32) * 0.1),
        "fc_w3": (jax.random.normal(k3, (c, c // 16), jnp.float32) * 0.1),
        "conv_w": (jax.random.normal(k4, (c,), jnp.float32) * 0.1),
        "conv_b": (jax.random.normal(k5, (), jnp.float32) * 0.1),
        "bn_gamma": jnp.float32(1.0),
        "bn_beta": jnp.float32(0.0),
        "bn_mean": jnp.float32(0.0),
        "bn_var": jnp.float32(1.0),
    }


if __name__ == "__main__":
    B, C, H, W = 2, 32, 16, 16     # channel must be >= 16 (fc uses channel // 16)
    key = jax.random.PRNGKey(0)
    kx, kp = jax.random.split(key)
    x = jax.random.normal(kx, (B, C, H, W), jnp.float32)
    params = make_params(kp, C)

    out = jax.jit(sab_forward)(x, params)
    out = jax.block_until_ready(out)

    ref = sab_reference(x, params)
    assert out.shape == (B, C, H, W)
    err = float(jnp.max(jnp.abs(out - ref)))
    assert err < 1e-4, f"mismatch vs reference: max abs err = {err}"

    print("KERNEL_OK")
</pallas_src>

<mosaic_0001>
module attributes {stable_mosaic.version = 11 : i64} {
  func.func @_sab_kernel(%arg0: i32, %arg1: memref<2x32x256xf32, #tpu.memory_space<vmem>>, %arg2: memref<32x32xf32, #tpu.memory_space<vmem>>, %arg3: memref<32x2xf32, #tpu.memory_space<vmem>>, %arg4: memref<2x32xf32, #tpu.memory_space<vmem>>, %arg5: memref<32x1xf32, #tpu.memory_space<vmem>>, %arg6: memref<1xf32, #tpu.memory_space<smem>>, %arg7: memref<2x32x256xf32, #tpu.memory_space<vmem>>) attributes {dimension_semantics = [#tpu.dimension_semantics<parallel>], iteration_bounds = array<i64: 1>, scalar_prefetch = 0 : i64, scratch_operands = 0 : i64, tpu.core_type = #tpu.core_type<tc>, window_params = [{transform_indices = @transform_0, window_bounds = array<i64: 2, 32, 256>}, {pipeline_mode = #tpu.pipeline_mode<synchronous>, transform_indices = @transform_1, window_bounds = array<i64: 32, 32>}, {pipeline_mode = #tpu.pipeline_mode<synchronous>, transform_indices = @transform_2, window_bounds = array<i64: 32, 2>}, {pipeline_mode = #tpu.pipeline_mode<synchronous>, transform_indices = @transform_3, window_bounds = array<i64: 2, 32>}, {pipeline_mode = #tpu.pipeline_mode<synchronous>, transform_indices = @transform_4, window_bounds = array<i64: 32, 1>}, {transform_indices = @transform_5, window_bounds = array<i64: 1>}, {transform_indices = @transform_6, window_bounds = array<i64: 2, 32, 256>}]} {
    %c0 = arith.constant 0 : index
    %c0_0 = arith.constant 0 : index
    %c0_1 = arith.constant 0 : index
    %0 = vector.load %arg1[%c0, %c0_0, %c0_1] : memref<2x32x256xf32, #tpu.memory_space<vmem>>, vector<2x32x256xf32>
    %cst = arith.constant dense<0.000000e+00> : vector<2x32xf32>
    %1 = vector.multi_reduction <add>, %0, %cst [2] : vector<2x32x256xf32> to vector<2x32xf32>
    %cst_2 = arith.constant 3.906250e-03 : f32
    %2 = vector.broadcast %cst_2 : f32 to vector<2x32xf32>
    %3 = arith.mulf %1, %2 : vector<2x32xf32>
    %c0_3 = arith.constant 0 : index
    %c0_4 = arith.constant 0 : index
    %4 = vector.load %arg2[%c0_3, %c0_4] : memref<32x32xf32, #tpu.memory_space<vmem>>, vector<32x32xf32>
    %cst_5 = arith.constant dense<0.000000e+00> : vector<2x32xf32>
    %5 = tpu.matmul %3, %4, %cst_5 {dimension_numbers = #tpu.dot_dimension_numbers<[1], [0], [0], [1], [0, 0, 1, 1], [], []>} : vector<2x32xf32>, vector<32x32xf32>, vector<2x32xf32> -> vector<2x32xf32>
    %c0_6 = arith.constant 0 : index
    %c0_7 = arith.constant 0 : index
    %6 = vector.load %arg3[%c0_6, %c0_7] : memref<32x2xf32, #tpu.memory_space<vmem>>, vector<32x2xf32>
    %cst_8 = arith.constant dense<0.000000e+00> : vector<2x2xf32>
    %7 = tpu.matmul %5, %6, %cst_8 {dimension_numbers = #tpu.dot_dimension_numbers<[1], [0], [0], [1], [0, 0, 1, 1], [], []>} : vector<2x32xf32>, vector<32x2xf32>, vector<2x2xf32> -> vector<2x2xf32>
    %cst_9 = arith.constant 0.000000e+00 : f32
    %8 = vector.broadcast %cst_9 : f32 to vector<2x2xf32>
    %9 = arith.maximumf %7, %8 : vector<2x2xf32>
    %c0_10 = arith.constant 0 : index
    %c0_11 = arith.constant 0 : index
    %10 = vector.load %arg4[%c0_10, %c0_11] : memref<2x32xf32, #tpu.memory_space<vmem>>, vector<2x32xf32>
    %cst_12 = arith.constant dense<0.000000e+00> : vector<2x32xf32>
    %11 = tpu.matmul %9, %10, %cst_12 {dimension_numbers = #tpu.dot_dimension_numbers<[1], [0], [0], [1], [0, 0, 1, 1], [], []>} : vector<2x2xf32>, vector<2x32xf32>, vector<2x32xf32> -> vector<2x32xf32>
    %12 = arith.negf %11 : vector<2x32xf32>
    %13 = math.exp %12 : vector<2x32xf32>
    %cst_13 = arith.constant 1.000000e+00 : f32
    %14 = vector.broadcast %cst_13 : f32 to vector<2x32xf32>
    %15 = arith.addf %14, %13 : vector<2x32xf32>
    %16 = arith.divf %14, %15 : vector<2x32xf32>
    %c0_14 = arith.constant 0 : index
    %c0_15 = arith.constant 0 : index
    %17 = vector.load %arg5[%c0_14, %c0_15] : memref<32x1xf32, #tpu.memory_space<vmem>>, vector<32x1xf32>
    %18 = vector.shape_cast %17 : vector<32x1xf32> to vector<1x32x1xf32>
    %19 = arith.mulf %0, %0 : vector<2x32x256xf32>
    %20 = vector.broadcast %18 : vector<1x32x1xf32> to vector<2x32x256xf32>
    %21 = arith.mulf %19, %20 : vector<2x32x256xf32>
    %cst_16 = arith.constant dense<0.000000e+00> : vector<2x256xf32>
    %22 = vector.multi_reduction <add>, %21, %cst_16 [1] : vector<2x32x256xf32> to vector<2x256xf32>
    %23 = vector.shape_cast %22 : vector<2x256xf32> to vector<2x1x256xf32>
    %c0_17 = arith.constant 0 : index
    %24 = memref.load %arg6[%c0_17] : memref<1xf32, #tpu.memory_space<smem>>
    %25 = vector.broadcast %24 : f32 to vector<2x1x256xf32>
    %26 = arith.addf %23, %25 : vector<2x1x256xf32>
    %27 = vector.shape_cast %16 : vector<2x32xf32> to vector<2x32x1xf32>
    %28 = vector.broadcast %27 : vector<2x32x1xf32> to vector<2x32x256xf32>
    %29 = vector.broadcast %26 : vector<2x1x256xf32> to vector<2x32x256xf32>
    %30 = arith.mulf %28, %29 : vector<2x32x256xf32>
    %cst_18 = arith.constant 1.000000e+00 : f32
    %31 = vector.broadcast %cst_18 : f32 to vector<2x32x256xf32>
    %32 = arith.addf %30, %31 : vector<2x32x256xf32>
    %33 = arith.mulf %0, %32 : vector<2x32x256xf32>
    %c0_19 = arith.constant 0 : index
    %c0_20 = arith.constant 0 : index
    %c0_21 = arith.constant 0 : index
    %34 = vector.load %arg7[%c0_19, %c0_20, %c0_21] : memref<2x32x256xf32, #tpu.memory_space<vmem>>, vector<2x32x256xf32>
    tpu.vector_store %arg7[%c0_19, %c0_20, %c0_21], %33 {strides = array<i32>} : memref<2x32x256xf32, #tpu.memory_space<vmem>>, vector<2x32x256xf32>,
    return
  }
  func.func @transform_0(%arg0: i32) -> (i32, i32, i32) {
    %c0_i32 = arith.constant 0 : i32
    %c0_i32_0 = arith.constant 0 : i32
    %c0_i32_1 = arith.constant 0 : i32
    return %arg0, %c0_i32, %c0_i32_0 : i32, i32, i32
  }
  func.func @transform_1(%arg0: i32) -> (i32, i32) {
    %c0_i32 = arith.constant 0 : i32
    %c0_i32_0 = arith.constant 0 : i32
    %c0_i32_1 = arith.constant 0 : i32
    return %c0_i32, %c0_i32_0 : i32, i32
  }
  func.func @transform_2(%arg0: i32) -> (i32, i32) {
    %c0_i32 = arith.constant 0 : i32
    %c0_i32_0 = arith.constant 0 : i32
    %c0_i32_1 = arith.constant 0 : i32
    return %c0_i32, %c0_i32_0 : i32, i32
  }
  func.func @transform_3(%arg0: i32) -> (i32, i32) {
    %c0_i32 = arith.constant 0 : i32
    %c0_i32_0 = arith.constant 0 : i32
    %c0_i32_1 = arith.constant 0 : i32
    return %c0_i32, %c0_i32_0 : i32, i32
  }
  func.func @transform_4(%arg0: i32) -> (i32, i32) {
    %c0_i32 = arith.constant 0 : i32
    %c0_i32_0 = arith.constant 0 : i32
    %c0_i32_1 = arith.constant 0 : i32
    return %c0_i32, %c0_i32_0 : i32, i32
  }
  func.func @transform_5(%arg0: i32) -> i32 {
    %c0_i32 = arith.constant 0 : i32
    %c0_i32_0 = arith.constant 0 : i32
    return %c0_i32 : i32
  }
  func.func @transform_6(%arg0: i32) -> (i32, i32, i32) {
    %c0_i32 = arith.constant 0 : i32
    %c0_i32_0 = arith.constant 0 : i32
    %c0_i32_1 = arith.constant 0 : i32
    return %arg0, %c0_i32, %c0_i32_0 : i32, i32, i32
  }
}

</mosaic_0001>

<llo_original>
// kernel: sab_forward.1
$region0: #{sab_forward.1}
  #allocation0 [shape = 'u32[]', space=smem, size = 0x4, offset = 0x4, fixed_abs, tag = 'smem constant byte address 0x4 - core index']
  #allocation1 [shape = 'u32[144,128]{1,0:T(1,128)}', space=vmem, size = 0x12000, scoped, tag = 'internal scratch']
  #allocation2 [shape = 'f32[1]{0:T(128)S(6)}', space=smem, size = 0x200, scoped, tag = 'scoped memory for sab_forward.1']
  %s0 = inlined_call_operand.vmem [shape: f32[2,32,256], index: 0, kind: input, shape index: {}]
  %s1 = inlined_call_operand.vmem [shape: f32[32,32], index: 1, kind: input, shape index: {}]
  %s2 = inlined_call_operand.vmem [shape: f32[32,2], index: 2, kind: input, shape index: {}]
  %s3 = inlined_call_operand.vmem [shape: f32[2,32], index: 3, kind: input, shape index: {}]
  %s4 = inlined_call_operand.vmem [shape: f32[32,1], index: 4, kind: input, shape index: {}]
  %s5 = inlined_call_operand.<no memory space> [shape: f32[1], index: 5, kind: input, shape index: {}]
  %s6 = inlined_call_operand.vmem [shape: f32[2,32,256], index: 6, kind: output, shape index: {}]
  %s7 = sld [smem:[#allocation0]]
  $region34: #{sab_forward.1} parent=0
    _
  %s9 = ssub.s32 1, %s7
  %s10 = scalar_select 0, %s9, %s7
  %11 = sst [smem:[#allocation2]] %s5
  // Predicated region
  $region2: #{sab_forward.1} parent=0 // pred_check
    _
  $region3: #{sab_forward.1} parent=0 // pred_check_branch
    %13 = sbr.rel (0) target = $region5
  $region4: #{sab_forward.1} parent=0 // pred_region
    _
  $region5: #{sab_forward.1} parent=0 // pred_fallthru
    _
  // Predicated region
  $region6: #{sab_forward.1} parent=0 // pred_check
    _
  $region7: #{sab_forward.1} parent=0 // pred_check_branch
    %15 = sbr.rel (0) target = $region9
  $region8: #{sab_forward.1} parent=0 // pred_region
    _
  $region9: #{sab_forward.1} parent=0 // pred_fallthru
    _
  // Predicated region
  $region10: #{sab_forward.1} parent=0 // pred_check
    _
  $region11: #{sab_forward.1} parent=0 // pred_check_branch
    %17 = sbr.rel (0) target = $region13
  $region12: #{sab_forward.1} parent=0 // pred_region
    _
  $region13: #{sab_forward.1} parent=0 // pred_fallthru
    _
  // Predicated region
  $region14: #{sab_forward.1} parent=0 // pred_check
    _
  $region15: #{sab_forward.1} parent=0 // pred_check_branch
    %19 = sbr.rel (0) target = $region17
  $region16: #{sab_forward.1} parent=0 // pred_region
    _
  $region17: #{sab_forward.1} parent=0 // pred_fallthru
    _
  // Predicated region
  $region18: #{sab_forward.1} parent=0 // pred_check
    _
  $region19: #{sab_forward.1} parent=0 // pred_check_branch
    %21 = sbr.rel (0) target = $region21
  $region20: #{sab_forward.1} parent=0 // pred_region
    _
  $region21: #{sab_forward.1} parent=0 // pred_fallthru
    _
  // Predicated region
  $region22: #{sab_forward.1} parent=0 // pred_check
    _
  $region23: #{sab_forward.1} parent=0 // pred_check_branch
    %23 = sbr.rel (0) target = $region25
  $region24: #{sab_forward.1} parent=0 // pred_region
    _
  $region25: #{sab_forward.1} parent=0 // pred_fallthru
    _
  %v24 = vld [vmem:[%s0] sm:$0xff]
  %v25 = vld [vmem:[%s0 + $0x8] sm:$0xff]
  %v26 = vld [vmem:[%s0 + $0x10] sm:$0xff]
  %v27 = vld [vmem:[%s0 + $0x18] sm:$0xff]
  %v28 = vld [vmem:[%s0 + $0x20] sm:$0xff]
  %v29 = vld [vmem:[%s0 + $0x28] sm:$0xff]
  %v30 = vld [vmem:[%s0 + $0x30] sm:$0xff]
  %v31 = vld [vmem:[%s0 + $0x38] sm:$0xff]
  %v32 = vld [vmem:[%s0 + $0x40] sm:$0xff]
  %v33 = vld [vmem:[%s0 + $0x48] sm:$0xff]
  %v34 = vld [vmem:[%s0 + $0x50] sm:$0xff]
  %v35 = vld [vmem:[%s0 + $0x58] sm:$0xff]
  %v36 = vld [vmem:[%s0 + $0x60] sm:$0xff]
  %v37 = vld [vmem:[%s0 + $0x68] sm:$0xff]
  %v38 = vld [vmem:[%s0 + $0x70] sm:$0xff]
  %v39 = vld [vmem:[%s0 + $0x78] sm:$0xff]
  %v40 = vadd.f32 %v24, %v25
  %41 = vadd.xlane.f32.xlu0 %v40
  %v42 = vpop.xlane.xlu0 %41
  %v43 = vadd.f32 %v26, %v27
  %44 = vadd.xlane.f32.xlu0 %v43
  %v45 = vpop.xlane.xlu0 %44
  %v46 = vadd.f32 %v28, %v29
  %47 = vadd.xlane.f32.xlu0 %v46
  %v48 = vpop.xlane.xlu0 %47
  %v49 = vadd.f32 %v30, %v31
  %50 = vadd.xlane.f32.xlu0 %v49
  %v51 = vpop.xlane.xlu0 %50
  %v52 = vadd.f32 %v32, %v33
  %53 = vadd.xlane.f32.xlu0 %v52
  %v54 = vpop.xlane.xlu0 %53
  %v55 = vadd.f32 %v34, %v35
  %56 = vadd.xlane.f32.xlu0 %v55
  %v57 = vpop.xlane.xlu0 %56
  %v58 = vadd.f32 %v36, %v37
  %59 = vadd.xlane.f32.xlu0 %v58
  %v60 = vpop.xlane.xlu0 %59
  %v61 = vadd.f32 %v38, %v39
  %62 = vadd.xlane.f32.xlu0 %v61
  %v63 = vpop.xlane.xlu0 %62
  %v64 = vmul.f32 %v42, 0.00390625
  %v65 = vmul.f32 %v45, 0.00390625
  %v66 = vmul.f32 %v48, 0.00390625
  %v67 = vmul.f32 %v51, 0.00390625
  %v68 = vmul.f32 %v54, 0.00390625
  %v69 = vmul.f32 %v57, 0.00390625
  %v70 = vmul.f32 %v60, 0.00390625
  %v71 = vmul.f32 %v63, 0.00390625
  %v72 = vld [vmem:[%s1] sm:$0xff]
  %v73 = vld [vmem:[%s1 + $0x8] sm:$0xff]
  %v74 = vld [vmem:[%s1 + $0x10] sm:$0xff]
  %v75 = vld [vmem:[%s1 + $0x18] sm:$0xff]
  %v84 = vlaneseq
  %v85 = vand.u32 %v84, 127
  %v86 = vlaneseq
  %v87 = vshrl.u32 %v86, 7
  %v88 = vsub.s32 %v85, %v87
  %v89 = vrot.slane %v64, %v88
  %v90 = vadd.s32 %v85, 4294967288
  %v91 = vlaneseq
  %v92 = vshrl.u32 %v91, 7
  %v93 = vsub.s32 %v90, %v92
  %v94 = vrot.slane %v65, %v93
  %vm95 = vcmask 130112
  %v96 = vsel %vm95, %v94, %v89
  %v97 = vadd.s32 %v85, 4294967280
  %v98 = vlaneseq
  %v99 = vshrl.u32 %v98, 7
  %v100 = vsub.s32 %v97, %v99
  %v101 = vrot.slane %v66, %v100
  %vm102 = vcmask 195712
  %v103 = vsel %vm102, %v101, %v96
  %v104 = vadd.s32 %v85, 4294967272
  %v105 = vlaneseq
  %v106 = vshrl.u32 %v105, 7
  %v107 = vsub.s32 %v104, %v106
  %v108 = vrot.slane %v67, %v107
  %vm109 = vcmask 261312
  %v110 = vsel %vm109, %v108, %v103
  %v111 = vlaneseq
  %v112 = vshrl.u32 %v111, 7
  %v113 = vsub.s32 %v85, %v112
  %v114 = vrot.slane %v68, %v113
  %v115 = vlaneseq
  %v116 = vshrl.u32 %v115, 7
  %v117 = vsub.s32 %v90, %v116
  %v118 = vrot.slane %v69, %v117
  %v119 = vsel %vm95, %v118, %v114
  %v120 = vlaneseq
  %v121 = vshrl.u32 %v120, 7
  %v122 = vsub.s32 %v97, %v121
  %v123 = vrot.slane %v70, %v122
  %v124 = vsel %vm102, %v123, %v119
  %v125 = vlaneseq
  %v126 = vshrl.u32 %v125, 7
  %v127 = vsub.s32 %v104, %v126
  %v128 = vrot.slane %v71, %v127
  %v129 = vsel %vm109, %v128, %v124
  %vm130 = vcmask 1041409
  %v131 = vsel %vm130, %v129, %v110
  %vm132 = vcmask 261120
  %v133 = vsel %vm132, %v131, 0
  %135 = vmatprep.subr.mxu0 0.0
  %136 = vmatpush1.msra.mxu0 %v72
  %137 = vmatprep.subr.mxu0 0.0
  %138 = vmatpush1.msra.mxu0 %v73
  %139 = vmatprep.subr.mxu0 0.0
  %140 = vmatpush1.msra.mxu0 %v74
  %141 = vmatprep.subr.mxu0 0.0
  %142 = vmatpush1.msra.mxu0 %v75
  %143 = vmatprep.subr.mxu0 0.0
  %144 = vmatpush1.msra.mxu0 0.0
  %145 = vmatprep.subr.mxu0 0.0
  %146 = vmatpush1.msra.mxu0 0.0
  %147 = vmatprep.subr.mxu0 0.0
  %148 = vmatpush1.msra.mxu0 0.0
  %149 = vmatprep.subr.mxu0 0.0
  %150 = vmatpush1.msra.mxu0 0.0
  %151 = vmatprep.subr.mxu0 0.0
  %152 = vmatpush1.msra.mxu0 0.0
  %153 = vmatprep.subr.mxu0 0.0
  %154 = vmatpush1.msra.mxu0 0.0
  %155 = vmatprep.subr.mxu0 0.0
  %156 = vmatpush1.msra.mxu0 0.0
  %157 = vmatprep.subr.mxu0 0.0
  %158 = vmatpush1.msra.mxu0 0.0
  %159 = vmatprep.subr.mxu0 0.0
  %160 = vmatpush1.msra.mxu0 0.0
  %161 = vmatprep.subr.mxu0 0.0
  %162 = vmatpush1.msra.mxu0 0.0
  %163 = vmatprep.subr.mxu0 0.0
  %164 = vmatpush1.msra.mxu0 0.0
  %165 = vmatprep.subr.mxu0 0.0
  %166 = vmatpush1.msra.mxu0 0.0
  %167 = vmatprep.subr.mxu0 0.0
  %168 = vmatpush1.msra.mxu0 0.0
  %169 = vmatprep.subr.mxu0 0.0
  %170 = vmatpush1.msra.mxu0 0.0
  %171 = vmatprep.subr.mxu0 0.0
  %172 = vmatpush1.msra.mxu0 0.0
  %173 = vmatprep.subr.mxu0 0.0
  %174 = vmatpush1.msra.mxu0 0.0
  %175 = vmatprep.subr.mxu0 0.0
  %176 = vmatpush1.msra.mxu0 0.0
  %177 = vmatprep.subr.mxu0 0.0
  %178 = vmatpush1.msra.mxu0 0.0
  %179 = vmatprep.subr.mxu0 0.0
  %180 = vmatpush1.msra.mxu0 0.0
  %181 = vmatprep.subr.mxu0 0.0
  %182 = vmatpush1.msra.mxu0 0.0
  %183 = vmatprep.subr.mxu0 0.0
  %184 = vmatpush1.msra.mxu0 0.0
  %185 = vmatprep.subr.mxu0 0.0
  %186 = vmatpush1.msra.mxu0 0.0
  %187 = vmatprep.subr.mxu0 0.0
  %188 = vmatpush1.msra.mxu0 0.0
  %189 = vmatprep.subr.mxu0 0.0
  %190 = vmatpush1.msra.mxu0 0.0
  %191 = vmatprep.subr.mxu0 0.0
  %192 = vmatpush1.msra.mxu0 0.0
  %193 = vmatprep.subr.mxu0 0.0
  %194 = vmatpush1.msra.mxu0 0.0
  %195 = vmatprep.subr.mxu0 0.0
  %196 = vmatpush1.msra.mxu0 0.0
  %197 = vmatprep.subr.mxu0 0.0
  %198 = vmatpush1.msra.mxu0 0.0
  %199 = vmatprep.mubr.f32.mxu0 0.0
  %200 = vmatmul.mubr.f32.gmra.mrb[0].mxu0 %v133
  %v201 = vpop.f32.mrb[0].mxu0
  %v202 = vadd.f32 0.0, %v201
  %v203 = vpop.f32.mrb[0].mxu0
  %204 = vdwg.mxu0
  %v205 = vld [vmem:[%s2] sm:$0xff]
  %v206 = vld [vmem:[%s2 + $0x8] sm:$0xff]
  %v207 = vld [vmem:[%s2 + $0x10] sm:$0xff]
  %v208 = vld [vmem:[%s2 + $0x18] sm:$0xff]
  %v210 = vsel %vm132, %v202, 0
  %212 = vmatprep.subr.mxu0 0.0
  %213 = vmatpush1.msra.mxu0 %v205
  %214 = vmatprep.subr.mxu0 0.0
  %215 = vmatpush1.msra.mxu0 %v206
  %216 = vmatprep.subr.mxu0 0.0
  %217 = vmatpush1.msra.mxu0 %v207
  %218 = vmatprep.subr.mxu0 0.0
  %219 = vmatpush1.msra.mxu0 %v208
  %220 = vmatprep.subr.mxu0 0.0
  %221 = vmatpush1.msra.mxu0 0.0
  %222 = vmatprep.subr.mxu0 0.0
  %223 = vmatpush1.msra.mxu0 0.0
  %224 = vmatprep.subr.mxu0 0.0
  %225 = vmatpush1.msra.mxu0 0.0
  %226 = vmatprep.subr.mxu0 0.0
  %227 = vmatpush1.msra.mxu0 0.0
  %228 = vmatprep.subr.mxu0 0.0
  %229 = vmatpush1.msra.mxu0 0.0
  %230 = vmatprep.subr.mxu0 0.0
  %231 = vmatpush1.msra.mxu0 0.0
  %232 = vmatprep.subr.mxu0 0.0
  %233 = vmatpush1.msra.mxu0 0.0
  %234 = vmatprep.subr.mxu0 0.0
  %235 = vmatpush1.msra.mxu0 0.0
  %236 = vmatprep.subr.mxu0 0.0
  %237 = vmatpush1.msra.mxu0 0.0
  %238 = vmatprep.subr.mxu0 0.0
  %239 = vmatpush1.msra.mxu0 0.0
  %240 = vmatprep.subr.mxu0 0.0
  %241 = vmatpush1.msra.mxu0 0.0
  %242 = vmatprep.subr.mxu0 0.0
  %243 = vmatpush1.msra.mxu0 0.0
  %244 = vmatprep.subr.mxu0 0.0
  %245 = vmatpush1.msra.mxu0 0.0
  %246 = vmatprep.subr.mxu0 0.0
  %247 = vmatpush1.msra.mxu0 0.0
  %248 = vmatprep.subr.mxu0 0.0
  %249 = vmatpush1.msra.mxu0 0.0
  %250 = vmatprep.subr.mxu0 0.0
  %251 = vmatpush1.msra.mxu0 0.0
  %252 = vmatprep.subr.mxu0 0.0
  %253 = vmatpush1.msra.mxu0 0.0
  %254 = vmatprep.subr.mxu0 0.0
  %255 = vmatpush1.msra.mxu0 0.0
  %256 = vmatprep.subr.mxu0 0.0
  %257 = vmatpush1.msra.mxu0 0.0
  %258 = vmatprep.subr.mxu0 0.0
  %259 = vmatpush1.msra.mxu0 0.0
  %260 = vmatprep.subr.mxu0 0.0
  %261 = vmatpush1.msra.mxu0 0.0
  %262 = vmatprep.subr.mxu0 0.0
  %263 = vmatpush1.msra.mxu0 0.0
  %264 = vmatprep.subr.mxu0 0.0
  %265 = vmatpush1.msra.mxu0 0.0
  %266 = vmatprep.subr.mxu0 0.0
  %267 = vmatpush1.msra.mxu0 0.0
  %268 = vmatprep.subr.mxu0 0.0
  %269 = vmatpush1.msra.mxu0 0.0
  %270 = vmatprep.subr.mxu0 0.0
  %271 = vmatpush1.msra.mxu0 0.0
  %272 = vmatprep.subr.mxu0 0.0
  %273 = vmatpush1.msra.mxu0 0.0
  %274 = vmatprep.subr.mxu0 0.0
  %275 = vmatpush1.msra.mxu0 0.0
  %276 = vmatprep.mubr.f32.mxu0 0.0
  %277 = vmatmul.mubr.f32.gmra.mrb[0].mxu0 %v210
  %v278 = vpop.f32.mrb[0].mxu0
  %v279 = vadd.f32 0.0, %v278
  %v280 = vpop.f32.mrb[0].mxu0
  %281 = vdwg.mxu0
  %v282 = vmax.f32 %v279, 0.0
  %v283 = vld [vmem:[%s3] sm:$0x3]
  %vm284 = vcmask 15360
  %v286 = vsel %vm284, %v282, 0
  %vm288 = vcmask 1041408
  %v290 = vsel %vm288, %v283, 0
  %292 = vmatprep.subr.mxu0 0.0
  %293 = vmatpush1.msra.mxu0 %v290
  %294 = vmatprep.subr.mxu0 0.0
  %295 = vmatpush1.msra.mxu0 0.0
  %296 = vmatprep.subr.mxu0 0.0
  %297 = vmatpush1.msra.mxu0 0.0
  %298 = vmatprep.subr.mxu0 0.0
  %299 = vmatpush1.msra.mxu0 0.0
  %300 = vmatprep.subr.mxu0 0.0
  %301 = vmatpush1.msra.mxu0 0.0
  %302 = vmatprep.subr.mxu0 0.0
  %303 = vmatpush1.msra.mxu0 0.0
  %304 = vmatprep.subr.mxu0 0.0
  %305 = vmatpush1.msra.mxu0 0.0
  %306 = vmatprep.subr.mxu0 0.0
  %307 = vmatpush1.msra.mxu0 0.0
  %308 = vmatprep.subr.mxu0 0.0
  %309 = vmatpush1.msra.mxu0 0.0
  %310 = vmatprep.subr.mxu0 0.0
  %311 = vmatpush1.msra.mxu0 0.0
  %312 = vmatprep.subr.mxu0 0.0
  %313 = vmatpush1.msra.mxu0 0.0
  %314 = vmatprep.subr.mxu0 0.0
  %315 = vmatpush1.msra.mxu0 0.0
  %316 = vmatprep.subr.mxu0 0.0
  %317 = vmatpush1.msra.mxu0 0.0
  %318 = vmatprep.subr.mxu0 0.0
  %319 = vmatpush1.msra.mxu0 0.0
  %320 = vmatprep.subr.mxu0 0.0
  %321 = vmatpush1.msra.mxu0 0.0
  %322 = vmatprep.subr.mxu0 0.0
  %323 = vmatpush1.msra.mxu0 0.0
  %324 = vmatprep.subr.mxu0 0.0
  %325 = vmatpush1.msra.mxu0 0.0
  %326 = vmatprep.subr.mxu0 0.0
  %327 = vmatpush1.msra.mxu0 0.0
  %328 = vmatprep.subr.mxu0 0.0
  %329 = vmatpush1.msra.mxu0 0.0
  %330 = vmatprep.subr.mxu0 0.0
  %331 = vmatpush1.msra.mxu0 0.0
  %332 = vmatprep.subr.mxu0 0.0
  %333 = vmatpush1.msra.mxu0 0.0
  %334 = vmatprep.subr.mxu0 0.0
  %335 = vmatpush1.msra.mxu0 0.0
  %336 = vmatprep.subr.mxu0 0.0
  %337 = vmatpush1.msra.mxu0 0.0
  %338 = vmatprep.subr.mxu0 0.0
  %339 = vmatpush1.msra.mxu0 0.0
  %340 = vmatprep.subr.mxu0 0.0
  %341 = vmatpush1.msra.mxu0 0.0
  %342 = vmatprep.subr.mxu0 0.0
  %343 = vmatpush1.msra.mxu0 0.0
  %344 = vmatprep.subr.mxu0 0.0
  %345 = vmatpush1.msra.mxu0 0.0
  %346 = vmatprep.subr.mxu0 0.0
  %347 = vmatpush1.msra.mxu0 0.0
  %348 = vmatprep.subr.mxu0 0.0
  %349 = vmatpush1.msra.mxu0 0.0
  %350 = vmatprep.subr.mxu0 0.0
  %351 = vmatpush1.msra.mxu0 0.0
  %352 = vmatprep.subr.mxu0 0.0
  %353 = vmatpush1.msra.mxu0 0.0
  %354 = vmatprep.subr.mxu0 0.0
  %355 = vmatpush1.msra.mxu0 0.0
  %356 = vmatprep.mubr.f32.mxu0 0.0
  %357 = vmatmul.mubr.f32.gmra.mrb[0].mxu0 %v286
  %v358 = vpop.f32.mrb[0].mxu0
  %v359 = vadd.f32 0.0, %v358
  %v360 = vpop.f32.mrb[0].mxu0
  %361 = vdwg.mxu0
  %v362 = vxor.u32 %v359, 2147483648
  %v363 = vmul.f32 %v362, 1.442695
  %v364 = vpow.pop %v363
  %v365 = vadd.f32 %v364, 1.0
  %v366 = vrcp.pop %v365
  %v367 = vmul.f32 1.0, %v366
  %v368 = vld [vmem:[%s4] sm:$0xff]
  %v369 = vld [vmem:[%s4 + $0x8] sm:$0xff]
  %v370 = vld [vmem:[%s4 + $0x10] sm:$0xff]
  %v371 = vld [vmem:[%s4 + $0x18] sm:$0xff]
  %v372 = vmul.f32 %v24, %v24
  %v373 = vmul.f32 %v25, %v25
  %v374 = vmul.f32 %v26, %v26
  %v375 = vmul.f32 %v27, %v27
  %v376 = vmul.f32 %v28, %v28
  %v377 = vmul.f32 %v29, %v29
  %v378 = vmul.f32 %v30, %v30
  %v379 = vmul.f32 %v31, %v31
  %v380 = vmul.f32 %v32, %v32
  %v381 = vmul.f32 %v33, %v33
  %v382 = vmul.f32 %v34, %v34
  %v383 = vmul.f32 %v35, %v35
  %v384 = vmul.f32 %v36, %v36
  %v385 = vmul.f32 %v37, %v37
  %v386 = vmul.f32 %v38, %v38
  %v387 = vmul.f32 %v39, %v39
  %389 = vset.pattern.permute.xlu0 0
  %390 = vperm.xlu0 %389, %v368
  %v391 = vpop.permute.xlu0 %390
  %394 = vset.pattern.permute.xlu0 0
  %395 = vperm.xlu0 %394, %v369
  %v396 = vpop.permute.xlu0 %395
  %399 = vset.pattern.permute.xlu0 0
  %400 = vperm.xlu0 %399, %v370
  %v401 = vpop.permute.xlu0 %400
  %404 = vset.pattern.permute.xlu0 0
  %405 = vperm.xlu0 %404, %v371
  %v406 = vpop.permute.xlu0 %405
  %v408 = vmul.f32 %v372, %v391
  %v409 = vmul.f32 %v373, %v391
  %v410 = vmul.f32 %v374, %v396
  %v411 = vmul.f32 %v375, %v396
  %v412 = vmul.f32 %v376, %v401
  %v413 = vmul.f32 %v377, %v401
  %v414 = vmul.f32 %v378, %v406
  %v415 = vmul.f32 %v379, %v406
  %v416 = vmul.f32 %v380, %v391
  %v417 = vmul.f32 %v381, %v391
  %v418 = vmul.f32 %v382, %v396
  %v419 = vmul.f32 %v383, %v396
  %v420 = vmul.f32 %v384, %v401
  %v421 = vmul.f32 %v385, %v401
  %v422 = vmul.f32 %v386, %v406
  %v423 = vmul.f32 %v387, %v406
  %v424 = vadd.f32 %v408, %v410
  %v425 = vadd.f32 %v424, %v412
  %v426 = vadd.f32 %v425, %v414
  %v427 = vrot.slane %v426, 4
  %v428 = vadd.f32 %v426, %v427
  %v429 = vrot.slane %v428, 2
  %v430 = vadd.f32 %v428, %v429
  %v431 = vrot.slane %v430, 1
  %v432 = vadd.f32 %v430, %v431
  %v433 = vadd.f32 %v409, %v411
  %v434 = vadd.f32 %v433, %v413
  %v435 = vadd.f32 %v434, %v415
  %v436 = vrot.slane %v435, 4
  %v437 = vadd.f32 %v435, %v436
  %v438 = vrot.slane %v437, 2
  %v439 = vadd.f32 %v437, %v438
  %v440 = vrot.slane %v439, 1
  %v441 = vadd.f32 %v439, %v440
  %v442 = vadd.f32 %v416, %v418
  %v443 = vadd.f32 %v442, %v420
  %v444 = vadd.f32 %v443, %v422
  %v445 = vrot.slane %v444, 4
  %v446 = vadd.f32 %v444, %v445
  %v447 = vrot.slane %v446, 2
  %v448 = vadd.f32 %v446, %v447
  %v449 = vrot.slane %v448, 1
  %v450 = vadd.f32 %v448, %v449
  %v451 = vadd.f32 %v417, %v419
  %v452 = vadd.f32 %v451, %v421
  %v453 = vadd.f32 %v452, %v423
  %v454 = vrot.slane %v453, 4
  %v455 = vadd.f32 %v453, %v454
  %v456 = vrot.slane %v455, 2
  %v457 = vadd.f32 %v455, %v456
  %v458 = vrot.slane %v457, 1
  %v459 = vadd.f32 %v457, %v458
  %s460 = sld [smem:[#allocation2]]
  %v461 = vstv %s460
  %v462 = vadd.f32 %v432, %v461
  %v463 = vadd.f32 %v441, %v461
  %v464 = vadd.f32 %v450, %v461
  %v465 = vadd.f32 %v459, %v461
  %v466 = vlaneseq
  %v467 = vshrl.u32 %v466, 7
  %v468 = vsub.s32 0, %v467
  %v469 = vrot.slane %v367, %v468
  %471 = vbcast.lane.b32.xlu0 %v469, 256
  %v472 = vpop.permute.xlu0 %471
  %s474 = sor.u32 256, 8
  %475 = vbcast.lane.b32.xlu0 %v469, %s474
  %v476 = vpop.permute.xlu0 %475
  %s478 = sor.u32 256, 16
  %479 = vbcast.lane.b32.xlu0 %v469, %s478
  %v480 = vpop.permute.xlu0 %479
  %s482 = sor.u32 256, 24
  %483 = vbcast.lane.b32.xlu0 %v469, %s482
  %v484 = vpop.permute.xlu0 %483
  %v485 = vlaneseq
  %v486 = vshrl.u32 %v485, 7
  %v487 = vsub.s32 1, %v486
  %v488 = vrot.slane %v367, %v487
  %490 = vbcast.lane.b32.xlu0 %v488, 256
  %v491 = vpop.permute.xlu0 %490
  %s493 = sor.u32 256, 8
  %494 = vbcast.lane.b32.xlu0 %v488, %s493
  %v495 = vpop.permute.xlu0 %494
  %s497 = sor.u32 256, 16
  %498 = vbcast.lane.b32.xlu0 %v488, %s497
  %v499 = vpop.permute.xlu0 %498
  %s501 = sor.u32 256, 24
  %502 = vbcast.lane.b32.xlu0 %v488, %s501
  %v503 = vpop.permute.xlu0 %502
  %v504 = vmul.f32 %v472, %v462
  %v505 = vmul.f32 %v472, %v463
  %v506 = vmul.f32 %v476, %v462
  %v507 = vmul.f32 %v476, %v463
  %v508 = vmul.f32 %v480, %v462
  %v509 = vmul.f32 %v480, %v463
  %v510 = vmul.f32 %v484, %v462
  %v511 = vmul.f32 %v484, %v463
  %v512 = vmul.f32 %v491, %v464
  %v513 = vmul.f32 %v491, %v465
  %v514 = vmul.f32 %v495, %v464
  %v515 = vmul.f32 %v495, %v465
  %v516 = vmul.f32 %v499, %v464
  %v517 = vmul.f32 %v499, %v465
  %v518 = vmul.f32 %v503, %v464
  %v519 = vmul.f32 %v503, %v465
  %v520 = vadd.f32 %v504, 1.0
  %v521 = vadd.f32 %v505, 1.0
  %v522 = vadd.f32 %v506, 1.0
  %v523 = vadd.f32 %v507, 1.0
  %v524 = vadd.f32 %v508, 1.0
  %v525 = vadd.f32 %v509, 1.0
  %v526 = vadd.f32 %v510, 1.0
  %v527 = vadd.f32 %v511, 1.0
  %v528 = vadd.f32 %v512, 1.0
  %v529 = vadd.f32 %v513, 1.0
  %v530 = vadd.f32 %v514, 1.0
  %v531 = vadd.f32 %v515, 1.0
  %v532 = vadd.f32 %v516, 1.0
  %v533 = vadd.f32 %v517, 1.0
  %v534 = vadd.f32 %v518, 1.0
  %v535 = vadd.f32 %v519, 1.0
  %v536 = vmul.f32 %v24, %v520
  %v537 = vmul.f32 %v25, %v521
  %v538 = vmul.f32 %v26, %v522
  %v539 = vmul.f32 %v27, %v523
  %v540 = vmul.f32 %v28, %v524
  %v541 = vmul.f32 %v29, %v525
  %v542 = vmul.f32 %v30, %v526
  %v543 = vmul.f32 %v31, %v527
  %v544 = vmul.f32 %v32, %v528
  %v545 = vmul.f32 %v33, %v529
  %v546 = vmul.f32 %v34, %v530
  %v547 = vmul.f32 %v35, %v531
  %v548 = vmul.f32 %v36, %v532
  %v549 = vmul.f32 %v37, %v533
  %v550 = vmul.f32 %v38, %v534
  %v551 = vmul.f32 %v39, %v535
  %552 = vst [vmem:[%s6] sm:$0xff] %v536
  %553 = vst [vmem:[%s6 + $0x8] sm:$0xff] %v537
  %554 = vst [vmem:[%s6 + $0x10] sm:$0xff] %v538
  %555 = vst [vmem:[%s6 + $0x18] sm:$0xff] %v539
  %556 = vst [vmem:[%s6 + $0x20] sm:$0xff] %v540
  %557 = vst [vmem:[%s6 + $0x28] sm:$0xff] %v541
  %558 = vst [vmem:[%s6 + $0x30] sm:$0xff] %v542
  %559 = vst [vmem:[%s6 + $0x38] sm:$0xff] %v543
  %560 = vst [vmem:[%s6 + $0x40] sm:$0xff] %v544
  %561 = vst [vmem:[%s6 + $0x48] sm:$0xff] %v545
  %562 = vst [vmem:[%s6 + $0x50] sm:$0xff] %v546
  %563 = vst [vmem:[%s6 + $0x58] sm:$0xff] %v547
  %564 = vst [vmem:[%s6 + $0x60] sm:$0xff] %v548
  %565 = vst [vmem:[%s6 + $0x68] sm:$0xff] %v549
  %566 = vst [vmem:[%s6 + $0x70] sm:$0xff] %v550
  %567 = vst [vmem:[%s6 + $0x78] sm:$0xff] %v551
  // Predicated region
  $region26: #{sab_forward.1} parent=0 // pred_check
    _
  $region27: #{sab_forward.1} parent=0 // pred_check_branch
    %569 = sbr.rel (0) target = $region29
  $region28: #{sab_forward.1} parent=0 // pred_region
    _
  $region29: #{sab_forward.1} parent=0 // pred_fallthru
    _
  // Predicated region
  $region30: #{sab_forward.1} parent=0 // pred_check
    _
  $region31: #{sab_forward.1} parent=0 // pred_check_branch
    %571 = sbr.rel (0) target = $region33
  $region32: #{sab_forward.1} parent=0 // pred_region
    _
  $region33: #{sab_forward.1} parent=0 // pred_fallthru
    _

</llo_original>
